<compile_context>
chip_gen: v7x
topology: tpu7x:2x2x1
jax: 0.10.0
libtpu: 0.0.40
codegen_flags: <defaults>
</compile_context>

<pallas_src>
import math
from functools import partial

import jax
import jax.numpy as jnp
from jax.experimental import pallas as pl
from jax.experimental.pallas import tpu as pltpu

LANE = 128
MAX_TILE_ROWS = 4096  # (4096, 128) f32 = 2 MiB per operand per grid step


def _round_up(x: int, m: int) -> int:
    return ((x + m - 1) // m) * m


def _cdiv(a: int, b: int) -> int:
    return -(-a // b)


def _ema_kernel(alpha_ref, ema_ref, p_ref, out_ref):
    # alpha lives in SMEM, shape (1, 1), f32
    a = alpha_ref[0, 0]
    p = p_ref[...].astype(jnp.float32)          # widen bf16/f32 params on the VPU
    out_ref[...] = ema_ref[...] * a + p * (1.0 - a)


def _ema_pallas(alpha_arr, ema_slab, p_slab, tile_rows):
    rows_padded, _ = ema_slab.shape
    grid = (rows_padded // tile_rows,)
    return pl.pallas_call(
        _ema_kernel,
        out_shape=jax.ShapeDtypeStruct(ema_slab.shape, ema_slab.dtype),
        grid_spec=pltpu.PrefetchScalarGridSpec(
            num_scalar_prefetch=0,
            grid=grid,
            in_specs=[
                pl.BlockSpec(memory_space=pltpu.MemorySpace.SMEM),   # alpha scalar
                pl.BlockSpec((tile_rows, LANE), lambda i: (i, 0)),   # ema tile (f32)
                pl.BlockSpec((tile_rows, LANE), lambda i: (i, 0)),   # param tile
            ],
            out_specs=pl.BlockSpec((tile_rows, LANE), lambda i: (i, 0)),
        ),
        # True in-place update of the persistent (donated) EMA slab in HBM.
        input_output_aliases={1: 0},
        compiler_params=pltpu.CompilerParams(
            dimension_semantics=("parallel",),
            # 3 tiled operands x 2 buffers x 2 MiB = 12 MiB; 32 MiB gives headroom
            # on v5e (default scoped 16 MiB) and stays well inside v7x's 64 MiB.
            vmem_limit_bytes=32 << 20,
        ),
    )(alpha_arr, ema_slab, p_slab)


@partial(jax.jit, static_argnums=(3,), donate_argnums=(0,))
def _ema_update_jit(ema_slab, p_leaves, smoothing_factor, tile_rows):
    """Flatten the incoming params, pad to the slab layout, run the lerp kernel."""
    p_flat = jnp.concatenate([jnp.ravel(p) for p in p_leaves])
    total = ema_slab.shape[0] * LANE
    pad = total - p_flat.shape[0]
    p_slab = jnp.pad(p_flat, (0, pad)).reshape(ema_slab.shape[0], LANE)
    alpha_arr = smoothing_factor.astype(jnp.float32).reshape(1, 1)
    return _ema_pallas(alpha_arr, ema_slab, p_slab, tile_rows)


class EMA:
    """JAX/Pallas port of ca_diffusion.modules.ema.EMA.

    `params` plays the role of `model.named_parameters()`: a dict mapping
    parameter names to arrays (all assumed trainable / requires_grad=True).
    """

    def __init__(self, params, smoothing_factor: float = 0.999):
        if smoothing_factor < 0 or smoothing_factor > 1.0:
            raise ValueError("Smoothing factor must be between 0 and 1")
        self.smoothing_factor = jnp.full((1,), smoothing_factor, jnp.float32)

        # Canonical ordering + static metadata, cached once (no per-call jnp.prod).
        # NOTE: n.replace('.', '') can collide distinct names (inherited from the
        # PyTorch original); later entries would silently overwrite earlier ones.
        items = [(n.replace(".", ""), n, params[n]) for n in sorted(params)]
        self._buf_names = [b for b, _, _ in items]
        self._orig_names = [n for _, n, _ in items]
        self._shapes = [tuple(jnp.shape(p)) for _, _, p in items]
        self._sizes = [math.prod(s) for s in self._shapes]
        self._offsets = []
        off = 0
        for sz in self._sizes:
            self._offsets.append(off)
            off += sz
        self._n_elems = off

        # Tile sizing: cap at ~2 MiB/operand, keep >= ~8 grid steps when possible
        # (v7x megacore), sublane dim a multiple of 8.
        rows = max(_cdiv(self._n_elems, LANE), 1)
        tile_rows = min(MAX_TILE_ROWS, _round_up(max(_cdiv(rows, 8), 8), 8))
        self._tile_rows = tile_rows
        self._rows_padded = _round_up(rows, tile_rows)

        # Persistent padded f32 EMA slab (register_buffer equivalent), built once.
        ema_flat = jnp.concatenate(
            [jnp.ravel(jnp.asarray(p, jnp.float32)) for _, _, p in items])
        pad = self._rows_padded * LANE - self._n_elems
        self._ema_slab = jnp.pad(ema_flat, (0, pad)).reshape(self._rows_padded, LANE)

        self.model_backup = []

    def __call__(self, params):
        """forward(model): ema <- ema*alpha + p*(1-alpha), one fused jitted kernel."""
        p_leaves = tuple(jnp.asarray(params[n]) for n in self._orig_names)
        self._ema_slab = _ema_update_jit(
            self._ema_slab, p_leaves, self.smoothing_factor, self._tile_rows)
        return None  # matches PyTorch forward(); state is updated in place

    def _gather_ema(self):
        flat = self._ema_slab.reshape(-1)
        return {
            b: flat[o:o + sz].reshape(s)
            for b, o, sz, s in zip(self._buf_names, self._offsets,
                                   self._sizes, self._shapes)
        }

    @property
    def ema_params(self):
        return self._gather_ema()

    def save(self, params):
        self.model_backup = [jnp.array(p) for p in params.values()]

    def use_ema(self, params):
        bufs = self._gather_ema()
        return {n: bufs[n.replace(".", "")] for n in params}

    def backup(self, params):
        # TODO(synk): restores from self.model_backup; plain buffer copies, no kernel needed
        return {n: b for n, b in zip(params, self.model_backup)}


if __name__ == "__main__":
    key = jax.random.PRNGKey(0)
    k0, k1, k2, k3, k4 = jax.random.split(key, 5)

    # Synthetic "model" parameters (small conv + linear), PyTorch OIHW order kept.
    model_params = {
        "conv.weight": jax.random.normal(k0, (4, 3, 3, 3), jnp.float32),
        "conv.bias": jax.random.normal(k1, (4,), jnp.float32),
        "fc.weight": jax.random.normal(k2, (32, 64), jnp.float32),
        "fc.bias": jax.random.normal(k3, (32,), jnp.float32),
    }

    ema = EMA(model_params, smoothing_factor=0.999)

    # Two pretend optimizer steps — exercises the persistent, donated EMA slab.
    step1 = {
        n: p + 0.05 * jax.random.normal(jax.random.fold_in(k4, i), p.shape)
        for i, (n, p) in enumerate(model_params.items())
    }
    step2 = {
        n: p + 0.02 * jax.random.normal(jax.random.fold_in(k4, 100 + i), p.shape)
        for i, (n, p) in enumerate(model_params.items())
    }

    ema(step1)
    ema(step2)
    jax.block_until_ready(ema._ema_slab)

    got = ema.use_ema(model_params)
    jax.block_until_ready(jax.tree_util.tree_leaves(got))

    # Reference check (plain JAX, same f32 math as the kernel).
    a = jnp.float32(0.999)
    ok = True
    for n in model_params:
        ref = jnp.asarray(model_params[n], jnp.float32)
        ref = ref * a + jnp.asarray(step1[n], jnp.float32) * (1.0 - a)
        ref = ref * a + jnp.asarray(step2[n], jnp.float32) * (1.0 - a)
        if not jnp.allclose(got[n], ref, atol=1e-6, rtol=1e-6):
            ok = False

    print("KERNEL_OK" if ok else "KERNEL_MISMATCH")
</pallas_src>

<mosaic_0001>
module attributes {stable_mosaic.version = 11 : i64} {
  func.func @_ema_kernel(%arg0: i32, %arg1: memref<1x1xf32, #tpu.memory_space<smem>>, %arg2: memref<8x128xf32, #tpu.memory_space<vmem>>, %arg3: memref<8x128xf32, #tpu.memory_space<vmem>>, %arg4: memref<8x128xf32, #tpu.memory_space<vmem>>) attributes {dimension_semantics = [#tpu.dimension_semantics<parallel>], iteration_bounds = array<i64: 3>, scalar_prefetch = 0 : i64, scratch_operands = 0 : i64, tpu.core_type = #tpu.core_type<tc>, window_params = [{transform_indices = @transform_0, window_bounds = array<i64: 1, 1>}, {transform_indices = @transform_1, window_bounds = array<i64: 8, 128>}, {transform_indices = @transform_2, window_bounds = array<i64: 8, 128>}, {transform_indices = @transform_3, window_bounds = array<i64: 8, 128>}]} {
    %c0 = arith.constant 0 : index
    %c0_0 = arith.constant 0 : index
    %0 = memref.load %arg1[%c0, %c0_0] : memref<1x1xf32, #tpu.memory_space<smem>>
    %c0_1 = arith.constant 0 : index
    %c0_2 = arith.constant 0 : index
    %1 = vector.load %arg3[%c0_1, %c0_2] : memref<8x128xf32, #tpu.memory_space<vmem>>, vector<8x128xf32>
    %c0_3 = arith.constant 0 : index
    %c0_4 = arith.constant 0 : index
    %2 = vector.load %arg2[%c0_3, %c0_4] : memref<8x128xf32, #tpu.memory_space<vmem>>, vector<8x128xf32>
    %3 = vector.broadcast %0 : f32 to vector<8x128xf32>
    %4 = arith.mulf %2, %3 : vector<8x128xf32>
    %cst = arith.constant 1.000000e+00 : f32
    %5 = arith.subf %cst, %0 : f32
    %6 = vector.broadcast %5 : f32 to vector<8x128xf32>
    %7 = arith.mulf %1, %6 : vector<8x128xf32>
    %8 = arith.addf %4, %7 : vector<8x128xf32>
    %c0_5 = arith.constant 0 : index
    %c0_6 = arith.constant 0 : index
    %9 = vector.load %arg4[%c0_5, %c0_6] : memref<8x128xf32, #tpu.memory_space<vmem>>, vector<8x128xf32>
    tpu.vector_store %arg4[%c0_5, %c0_6], %8 {strides = array<i32>} : memref<8x128xf32, #tpu.memory_space<vmem>>, vector<8x128xf32>,
    return
  }
  func.func @transform_0(%arg0: i32) -> (i32, i32) {
    %c0_i32 = arith.constant 0 : i32
    %c0_i32_0 = arith.constant 0 : i32
    %c0_i32_1 = arith.constant 0 : i32
    return %c0_i32, %c0_i32_0 : i32, i32
  }
  func.func @transform_1(%arg0: i32) -> (i32, i32) {
    %c0_i32 = arith.constant 0 : i32
    %c0_i32_0 = arith.constant 0 : i32
    return %arg0, %c0_i32 : i32, i32
  }
  func.func @transform_2(%arg0: i32) -> (i32, i32) {
    %c0_i32 = arith.constant 0 : i32
    %c0_i32_0 = arith.constant 0 : i32
    return %arg0, %c0_i32 : i32, i32
  }
  func.func @transform_3(%arg0: i32) -> (i32, i32) {
    %c0_i32 = arith.constant 0 : i32
    %c0_i32_0 = arith.constant 0 : i32
    return %arg0, %c0_i32 : i32, i32
  }
}

</mosaic_0001>

<llo_original>
// kernel: _ema_update_jit.1
$region0: #{_ema_update_jit.1}
  #allocation0 [shape = 'u32[]', space=smem, size = 0x4, offset = 0x4, fixed_abs, tag = 'smem constant byte address 0x4 - core index']
  #allocation1 [shape = 'u32[144,128]{1,0:T(1,128)}', space=vmem, size = 0x12000, scoped, tag = 'internal scratch']
  #allocation2 [shape = 'f32[1,1]{1,0:T(1,128)S(6)}', space=smem, size = 0x200, scoped, tag = 'scoped memory for _ema_update_jit.1']
  %s0 = inlined_call_operand.<no memory space> [shape: f32[1,1], index: 0, kind: input, shape index: {}]
  %s1 = inlined_call_operand.hbm [shape: f32[24,128], index: 1, kind: input, shape index: {}, may-alias: {1,3}]
  %s2 = inlined_call_operand.vmem [shape: f32[24,128], index: 2, kind: input, shape index: {}]
  %s3 = inlined_call_operand.hbm [shape: f32[24,128], index: 3, kind: output, shape index: {}, may-alias: {1,3}]
  %s4 = sld [smem:[#allocation0]]
  $region49: #{_ema_update_jit.1} parent=0
    _
  %s6 = ssub.s32 1, %s4
  %s7 = scalar_select 0, %s6, %s4
  %8 = sst [smem:[#allocation2]] %s0
  $region1: #{_ema_update_jit.1} parent=0
    #allocation3 [shape = 'u8[8192]{0}', space=vmem, size = 0x2000, scoped, tag = 'input window, operand 1']
    #allocation4 [shape = 's32[2]{0}', space=sflag, size = 0x8, scoped, tag = 'scoped memory for _ema_update_jit.1']
    #allocation5 [shape = 's32[2]{0}', space=sflag, size = 0x8, scoped, tag = 'scoped memory for _ema_update_jit.1']
    #allocation6 [shape = 'u8[8192]{0}', space=vmem, size = 0x2000, scoped, tag = 'output window, operand 0']
    %9 = vsyncpa [#allocation4], 0
    %s10 = scalar_lea.sflag [#allocation4], 1
    %11 = vsyncpa %s10, 0
    %12 = vsyncpa [#allocation5], 0
    %s13 = scalar_lea.sflag [#allocation5], 1
    %14 = vsyncpa %s13, 0
    loop: start=0, step=1, limit=5
    $region2: #{_ema_update_jit.1} parent=1 // loop_pre_header
      _
    $region3: #{_ema_update_jit.1} parent=1 // loop_header
      %s16 = sphi 0, %s20
      %p17 = scmp.ge.s32.totalorder %s16, 5
      %s24 = sphi 0, %s24
      %s26 = sphi 0, %s24
      %s27 = sphi 0, %s26
      %s41 = sphi 0, %s27
      %s47 = sphi 0, %s49
      %s50 = sphi 0, %s47
      %s51 = sphi 0, %s50
      %s67 = sphi 0, %s51
      %s73 = sphi 0, %s75
      %s76 = sphi 0, %s73
      %s77 = sphi 0, %s76
      %s93 = sphi 0, %s77
      %s99 = sphi 0, %s101
      %s102 = sphi 0, %s99
      %s103 = sphi 0, %s102
      %s119 = sphi 0, %s103
    $region4: #{_ema_update_jit.1} parent=1 // loop_header_branch
      %19 = sbr.rel (%p17) target = $region8
    $region5: #{_ema_update_jit.1} parent=1 // loop_body
      %s21 = ssub.s32 %s16, 1
      %s22 = ssub.s32 %s16, 2
      %s23 = sadd.s32 %s16, 1
      %s25 = sadd.s32 %s24, 1
      %p28 = scmp.eq.s32.totalorder %s16, 2
      %p29 = scmp.ne.s32.totalorder %s24, %s26
      %p30 = scmp.eq.s32.totalorder %s16, 0
      %p31 = por %p29, %p30
      %p32 = scmp.ne.s32.totalorder %s24, %s26
      %p33 = scmp.eq.s32.totalorder %s21, 2
      %p34 = por %p32, %p33
      %p35 = scmp.ne.s32.totalorder %s26, %s27
      %p36 = scmp.eq.s32.totalorder %s21, 0
      %p37 = por %p35, %p36
      %p38 = scmp.ne.s32.totalorder %s26, %s27
      %p39 = scmp.eq.s32.totalorder %s22, 2
      %p40 = por %p38, %p39
      %p42 = scmp.ne.s32.totalorder %s27, %s41
      %p43 = scmp.eq.s32.totalorder %s22, 0
      %p44 = por %p42, %p43
      %s45 = ssub.s32 %s16, %s23
      %p46 = scmp.eq.s32.totalorder %s45, 0
      %s48 = sadd.s32 %s47, 1
      %s49 = scalar_select %p46, %s47, %s48
      %p52 = pneg %p46
      %p53 = scmp.eq.s32.totalorder %s16, 2
      %p54 = por %p52, %p53
      %p55 = scmp.ne.s32.totalorder %s47, %s50
      %p56 = scmp.eq.s32.totalorder %s16, 0
      %p57 = por %p55, %p56
      %p58 = scmp.ne.s32.totalorder %s47, %s50
      %p59 = scmp.eq.s32.totalorder %s21, 2
      %p60 = por %p58, %p59
      %p61 = scmp.ne.s32.totalorder %s50, %s51
      %p62 = scmp.eq.s32.totalorder %s21, 0
      %p63 = por %p61, %p62
      %p64 = scmp.ne.s32.totalorder %s50, %s51
      %p65 = scmp.eq.s32.totalorder %s22, 2
      %p66 = por %p64, %p65
      %p68 = scmp.ne.s32.totalorder %s51, %s67
      %p69 = scmp.eq.s32.totalorder %s22, 0
      %p70 = por %p68, %p69
      %s71 = ssub.s32 %s16, %s23
      %p72 = scmp.eq.s32.totalorder %s71, 0
      %s74 = sadd.s32 %s73, 1
      %s75 = scalar_select %p72, %s73, %s74
      %p78 = pneg %p72
      %p79 = scmp.eq.s32.totalorder %s16, 2
      %p80 = por %p78, %p79
      %p81 = scmp.ne.s32.totalorder %s73, %s76
      %p82 = scmp.eq.s32.totalorder %s16, 0
      %p83 = por %p81, %p82
      %p84 = scmp.ne.s32.totalorder %s73, %s76
      %p85 = scmp.eq.s32.totalorder %s21, 2
      %p86 = por %p84, %p85
      %p87 = scmp.ne.s32.totalorder %s76, %s77
      %p88 = scmp.eq.s32.totalorder %s21, 0
      %p89 = por %p87, %p88
      %p90 = scmp.ne.s32.totalorder %s76, %s77
      %p91 = scmp.eq.s32.totalorder %s22, 2
      %p92 = por %p90, %p91
      %p94 = scmp.ne.s32.totalorder %s77, %s93
      %p95 = scmp.eq.s32.totalorder %s22, 0
      %p96 = por %p94, %p95
      %s97 = ssub.s32 %s16, %s23
      %p98 = scmp.eq.s32.totalorder %s97, 0
      %s100 = sadd.s32 %s99, 1
      %s101 = scalar_select %p98, %s99, %s100
      %p104 = pneg %p98
      %p105 = scmp.eq.s32.totalorder %s16, 2
      %p106 = por %p104, %p105
      %p107 = scmp.ne.s32.totalorder %s99, %s102
      %p108 = scmp.eq.s32.totalorder %s16, 0
      %p109 = por %p107, %p108
      %p110 = scmp.ne.s32.totalorder %s99, %s102
      %p111 = scmp.eq.s32.totalorder %s21, 2
      %p112 = por %p110, %p111
      %p113 = scmp.ne.s32.totalorder %s102, %s103
      %p114 = scmp.eq.s32.totalorder %s21, 0
      %p115 = por %p113, %p114
      %p116 = scmp.ne.s32.totalorder %s102, %s103
      %p117 = scmp.eq.s32.totalorder %s22, 2
      %p118 = por %p116, %p117
      %p120 = scmp.ne.s32.totalorder %s103, %s119
      %p121 = scmp.eq.s32.totalorder %s22, 0
      %p122 = por %p120, %p121
      %p123 = scmp.le.s32.totalorder 1, %s16
      %p124 = scmp.lt.s32.totalorder %s16, 4
      %p125 = pnand %p123, %p124
      %p126 = pneg %p125
      // Predicated region
      $region9: #{_ema_update_jit.1} parent=5 // pred_check
        _
      $region10: #{_ema_update_jit.1} parent=5 // pred_check_branch
        %128 = sbr.rel (%p125) target = $region12
      $region11: #{_ema_update_jit.1} parent=5 // pred_region
        %s129 = ssub.s32 %s16, 1
        // Predicated region
        $region13: #{_ema_update_jit.1} parent=11 // pred_check
          %p130 = pneg %p37
        $region14: #{_ema_update_jit.1} parent=11 // pred_check_branch
          %132 = sbr.rel (%p130) target = $region16
        $region15: #{_ema_update_jit.1} parent=11 // pred_region
          _
        $region16: #{_ema_update_jit.1} parent=11 // pred_fallthru
          _
      $region12: #{_ema_update_jit.1} parent=5 // pred_fallthru
        _
      %p133 = scmp.lt.s32.totalorder %s16, 3
      // Predicated region
      $region17: #{_ema_update_jit.1} parent=5 // pred_check
        %p134 = pneg %p133
      $region18: #{_ema_update_jit.1} parent=5 // pred_check_branch
        %136 = sbr.rel (%p134) target = $region20
      $region19: #{_ema_update_jit.1} parent=5 // pred_region
        // Predicated region
        $region21: #{_ema_update_jit.1} parent=19 // pred_check
          %p137 = pneg %p57
        $region22: #{_ema_update_jit.1} parent=19 // pred_check_branch
          %139 = sbr.rel (%p137) target = $region24
        $region23: #{_ema_update_jit.1} parent=19 // pred_region
          %s140 = sand.u32 %s47, 1
          %s141 = scalar_lea.sflag [#allocation4], %s140
          %s142 = sand.u32 %s47, 1
          %s143 = smul.addr %s142, 8
          %s144 = scalar_lea.vmem [#allocation3], %s143
          %s146 = ssub.s32 128, 128
          %147 = vsyncadd %s141, %s146
          %s148 = smul.addr %s16, 128
          %s149 = scalar_lea.hbm %s1, %s148
          %s151 = sshll.u32 %s144, 4
          %s152 = int_to_ptr.vmem [resolvable:$true] %s151
          %154 = dma.hbm_to_vmem [thread:$0]  %s149, 128, %s152, %s141
        $region24: #{_ema_update_jit.1} parent=19 // pred_fallthru
          _
        // Predicated region
        $region25: #{_ema_update_jit.1} parent=19 // pred_check
          %p155 = pneg %p83
        $region26: #{_ema_update_jit.1} parent=19 // pred_check_branch
          %157 = sbr.rel (%p155) target = $region28
        $region27: #{_ema_update_jit.1} parent=19 // pred_region
          %p158 = scmp.lt.s32.totalorder %s16, 2
          %s159 = scalar_select %p158, %s16, 2
          %s160 = smul.addr %s159, 8
          %s161 = scalar_lea.vmem %s2, %s160
        $region28: #{_ema_update_jit.1} parent=19 // pred_fallthru
          _
      $region20: #{_ema_update_jit.1} parent=5 // pred_fallthru
        _
      %p162 = scmp.le.s32.totalorder 1, %s16
      %p163 = scmp.lt.s32.totalorder %s16, 4
      %p164 = pnand %p162, %p163
      %p165 = pneg %p164
      // Predicated region
      $region29: #{_ema_update_jit.1} parent=5 // pred_check
        _
      $region30: #{_ema_update_jit.1} parent=5 // pred_check_branch
        %167 = sbr.rel (%p164) target = $region32
      $region31: #{_ema_update_jit.1} parent=5 // pred_region
        %s168 = ssub.s32 %s16, 1
        %s169 = sand.u32 %s50, 1
        %s170 = scalar_lea.sflag [#allocation4], %s169
        %s171 = sand.u32 %s50, 1
        %s172 = smul.addr %s171, 8
        %s173 = scalar_lea.vmem [#allocation3], %s172
        // Predicated region
        $region33: #{_ema_update_jit.1} parent=31 // pred_check
          %p174 = pneg %p63
        $region34: #{_ema_update_jit.1} parent=31 // pred_check_branch
          %176 = sbr.rel (%p174) target = $region36
        $region35: #{_ema_update_jit.1} parent=31 // pred_region
          %177 = dma.done %s170, 128
        $region36: #{_ema_update_jit.1} parent=31 // pred_fallthru
          _
        %p178 = pneg %p37
        %p179 = pneg %p34
        %s180 = sand.u32 %s50, 1
        %s181 = scalar_lea.sflag [#allocation4], %s180
        %s182 = sand.u32 %s50, 1
        %s183 = smul.addr %s182, 8
        %s184 = scalar_lea.vmem [#allocation3], %s183
        %p185 = pneg %p63
        %p186 = pneg %p60
        %p187 = scmp.lt.s32.totalorder %s21, 2
        %s188 = scalar_select %p187, %s21, 2
        %s189 = smul.addr %s188, 8
        %s190 = scalar_lea.vmem %s2, %s189
        %p191 = pneg %p89
        %p192 = pneg %p86
        %p193 = pneg %p115
        %p194 = pneg %p112
        %s195 = sand.u32 %s102, 1
        %s196 = scalar_lea.sflag [#allocation5], %s195
        %s197 = sand.u32 %s102, 1
        %s198 = smul.addr %s197, 8
        %s199 = scalar_lea.vmem [#allocation6], %s198
        %p200 = scmp.lt.s32.totalorder %s21, 2
        %s201 = scalar_select %p200, %s21, 2
        %s202 = smul.addr %s201, 8
        %s203 = scalar_lea.vmem %s2, %s202
        %s204 = sld [smem:[#allocation2]]
        %v205 = vld [vmem:[%s203] sm:$0xff]
        %v206 = vld [vmem:[%s173] sm:$0xff]
        %v207 = vstv %s204
        %v208 = vmul.f32 %v206, %v207
        %s209 = ssub.f32 1.0, %s204
        %v210 = vstv %s209
        %v211 = vmul.f32 %v205, %v210
        %v212 = vadd.f32 %v208, %v211
        %213 = vst [vmem:[%s199] sm:$0xff] %v212
        %s214 = sand.u32 %s102, 1
        %s215 = scalar_lea.sflag [#allocation5], %s214
        %s216 = sand.u32 %s102, 1
        %s217 = smul.addr %s216, 8
        %s218 = scalar_lea.vmem [#allocation6], %s217
        // Predicated region
        $region37: #{_ema_update_jit.1} parent=31 // pred_check
          %p219 = pneg %p112
        $region38: #{_ema_update_jit.1} parent=31 // pred_check_branch
          %221 = sbr.rel (%p219) target = $region40
        $region39: #{_ema_update_jit.1} parent=31 // pred_region
          %s223 = ssub.s32 128, 128
          %224 = vsyncadd %s215, %s223
          %s225 = smul.addr %s21, 128
          %s226 = scalar_lea.hbm %s3, %s225
          %s228 = sshll.u32 %s218, 4
          %s229 = int_to_ptr.vmem [resolvable:$true] %s228
          %231 = dma.vmem_to_hbm [thread:$0]  %s229, 128, %s226, %s215
        $region40: #{_ema_update_jit.1} parent=31 // pred_fallthru
          _
      $region32: #{_ema_update_jit.1} parent=5 // pred_fallthru
        _
      %p232 = scmp.le.s32.totalorder 2, %s16
      // Predicated region
      $region41: #{_ema_update_jit.1} parent=5 // pred_check
        %p233 = pneg %p232
      $region42: #{_ema_update_jit.1} parent=5 // pred_check_branch
        %235 = sbr.rel (%p233) target = $region44
      $region43: #{_ema_update_jit.1} parent=5 // pred_region
        %s236 = ssub.s32 %s16, 2
        // Predicated region
        $region45: #{_ema_update_jit.1} parent=43 // pred_check
          %p237 = pneg %p118
        $region46: #{_ema_update_jit.1} parent=43 // pred_check_branch
          %239 = sbr.rel (%p237) target = $region48
        $region47: #{_ema_update_jit.1} parent=43 // pred_region
          %s240 = sand.u32 %s103, 1
          %s241 = scalar_lea.sflag [#allocation5], %s240
          %s242 = sand.u32 %s103, 1
          %s243 = smul.addr %s242, 8
          %s244 = scalar_lea.vmem [#allocation6], %s243
          %245 = dma.done %s241, 128
        $region48: #{_ema_update_jit.1} parent=43 // pred_fallthru
          _
      $region44: #{_ema_update_jit.1} parent=5 // pred_fallthru
        _
    $region6: #{_ema_update_jit.1} parent=1 // loop_footer
      %s20 = sadd.s32 1, %s16
    $region7: #{_ema_update_jit.1} parent=1 // loop_footer_branch
      %15 = sbr.rel target = $region3
    $region8: #{_ema_update_jit.1} parent=1 // loop_exit
      _
    %246 = vsyncpa [#allocation4], 1
    %s247 = scalar_lea.sflag [#allocation4], 1
    %248 = vsyncpa %s247, 1
    %249 = vsyncpa [#allocation5], 1
    %s250 = scalar_lea.sflag [#allocation5], 1
    %251 = vsyncpa %s250, 1

</llo_original>
